<compile_context>
chip_gen: v6e
topology: v6e:2x2x1
jax: 0.10.0
libtpu: 0.0.40
codegen_flags: <defaults>
</compile_context>

<pallas_src>
import functools

import jax
import jax.numpy as jnp
from jax.experimental import pallas as pl
from jax.experimental.pallas import tpu as pltpu

LOG_STD_MIN = -20.0
LOG_STD_MAX = 0.0
_A = 0.5 * (LOG_STD_MAX - LOG_STD_MIN)   # 10.0
_C = LOG_STD_MIN + _A                    # -10.0  (MIN + A*(t+1) == A*t + C)

_LANE = 128


def _cdiv(a, b):
    return -(-a // b)


def actor_kernel(xt_ref, epst_ref, wh_ref, bh_ref, wheads_ref, bheads_ref,
                 out_ref, *, out_dim):
    # Feature-major: batch on the 128-lane axis, features on sublanes.
    # Hidden layer + ReLU:  h = relu(Wh @ x^T + bh)                [hidden, TB]
    h = jnp.dot(wh_ref[...], xt_ref[...], preferred_element_type=jnp.float32)
    h = jnp.maximum(h + bh_ref[...], 0.0)

    # Fused mu/log_std heads: one MXU pass -> [2*out_dim, TB].
    heads = jnp.dot(wheads_ref[...], h, preferred_element_type=jnp.float32)
    heads = heads + bheads_ref[...]

    # One dense tanh over the whole fused-heads block, then split on sublanes.
    th = jnp.tanh(heads)
    mu = th[:out_dim, :]
    std = jnp.exp(_A * th[out_dim:, :] + _C)        # folded log_std rescale + exp

    # Reparameterised Normal(mu, std) sample.
    action = mu + std * epst_ref[...]

    # Packed lane-dense output slab: rows = [action | mu | std].
    out_ref[0 * out_dim:1 * out_dim, :] = action
    out_ref[1 * out_dim:2 * out_dim, :] = mu
    out_ref[2 * out_dim:3 * out_dim, :] = std


def prepare_params(params):
    """One-time repack into the feature-major layout (outside the hot path)."""
    hidden = params["w_h"].shape[1]
    return dict(
        w_h=params["w_h"].T,                                   # [hidden, in_dim]
        b_h=params["b_h"].reshape(hidden, 1),                  # [hidden, 1]
        w_heads=jnp.concatenate(
            [params["w_mu"], params["w_ls"]], axis=1).T,       # [2*out_dim, hidden]
        b_heads=jnp.concatenate(
            [params["b_mu"], params["b_ls"]], axis=1).reshape(-1, 1),  # [2*out_dim, 1]
    )


def _select_tile(B, block_b):
    """Lane-aligned (multiple of 128) batch tile selection.

    Large tiles amortize per-grid-step overhead; >= 2 grid steps whenever B
    allows (so v7x megacore can shard); tiles rebalanced so tail padding is
    bounded by < 128 rows per step.
    """
    n_chunks = _cdiv(max(B, 1), _LANE)
    cap_chunks = max(1, min(block_b // _LANE, _cdiv(n_chunks, 2)))
    n_steps = _cdiv(n_chunks, cap_chunks)
    tb_chunks = _cdiv(n_chunks, n_steps)
    tb = tb_chunks * _LANE
    bp = n_steps * tb
    return tb, bp


def actor_forward(state, fused_params, eps, *, block_b=16384):
    """Fused Actor forward.  state: [B, in_dim], eps: [B, out_dim] ~ N(0,1).

    Returns (action, mu, std), each [B, out_dim].
    """
    B, in_dim = state.shape
    hidden = fused_params["w_h"].shape[0]
    out2 = fused_params["w_heads"].shape[0]
    out_dim = out2 // 2

    TB, Bp = _select_tile(B, block_b)

    # Feature-major inputs: batch on the 128-lane axis (wrapper-side plumbing).
    state_t = jnp.pad(state.T, ((0, 0), (0, Bp - B)))          # [in_dim, Bp]
    eps_t = jnp.pad(eps.T, ((0, 0), (0, Bp - B)))              # [out_dim, Bp]

    kernel = functools.partial(actor_kernel, out_dim=out_dim)

    packed = pl.pallas_call(
        kernel,
        out_shape=jax.ShapeDtypeStruct((3 * out_dim, Bp), jnp.float32),
        grid=(Bp // TB,),
        in_specs=[
            pl.BlockSpec((in_dim, TB), lambda i: (0, i)),        # state^T (batch-tiled)
            pl.BlockSpec((out_dim, TB), lambda i: (0, i)),       # eps^T   (batch-tiled)
            pl.BlockSpec((hidden, in_dim), lambda i: (0, 0)),    # Wh (resident)
            pl.BlockSpec((hidden, 1), lambda i: (0, 0)),         # bh
            pl.BlockSpec((out2, hidden), lambda i: (0, 0)),      # fused head weights
            pl.BlockSpec((out2, 1), lambda i: (0, 0)),           # fused head biases
        ],
        out_specs=pl.BlockSpec((3 * out_dim, TB), lambda i: (0, i)),
        compiler_params=pltpu.CompilerParams(
            dimension_semantics=("parallel",),          # megacore sharding on v7x
            vmem_limit_bytes=32 * 1024 * 1024),         # explicit; safe on v5e/v6e/v7x
    )(state_t, eps_t, fused_params["w_h"], fused_params["b_h"],
      fused_params["w_heads"], fused_params["b_heads"])

    packed = packed[:, :B]
    action = packed[0 * out_dim:1 * out_dim, :].T
    mu = packed[1 * out_dim:2 * out_dim, :].T
    std = packed[2 * out_dim:3 * out_dim, :].T
    return action, mu, std


def init_params(key, in_dim, out_dim, hidden=32, init_w=0.003):
    """Deterministic parameter init mirroring the PyTorch module's __init__."""
    k1, k2, k3, k4, k5, k6 = jax.random.split(key, 6)
    bound_h = 1.0 / jnp.sqrt(jnp.float32(in_dim))   # nn.Linear default init
    w_h = jax.random.uniform(k1, (in_dim, hidden), jnp.float32, -bound_h, bound_h)
    b_h = jax.random.uniform(k2, (1, hidden), jnp.float32, -bound_h, bound_h)
    w_mu = jax.random.uniform(k3, (hidden, out_dim), jnp.float32, -init_w, init_w)
    b_mu = jax.random.uniform(k4, (1, out_dim), jnp.float32, -init_w, init_w)
    w_ls = jax.random.uniform(k5, (hidden, out_dim), jnp.float32, -init_w, init_w)
    b_ls = jax.random.uniform(k6, (1, out_dim), jnp.float32, -init_w, init_w)
    return dict(w_h=w_h, b_h=b_h, w_mu=w_mu, b_mu=b_mu, w_ls=w_ls, b_ls=b_ls)


def reference_forward(state, params, eps):
    """Pure-JAX reference (batch-major) for correctness check."""
    x = jnp.maximum(state @ params["w_h"] + params["b_h"], 0.0)
    mu = jnp.tanh(x @ params["w_mu"] + params["b_mu"])
    log_std = jnp.tanh(x @ params["w_ls"] + params["b_ls"])
    log_std = LOG_STD_MIN + 0.5 * (LOG_STD_MAX - LOG_STD_MIN) * (log_std + 1.0)
    std = jnp.exp(log_std)
    return mu + std * eps, mu, std


if __name__ == "__main__":
    key = jax.random.PRNGKey(0)
    k_param, k_state, k_eps, k_state2, k_eps2 = jax.random.split(key, 5)

    in_dim, out_dim, hidden = 16, 4, 32
    params = init_params(k_param, in_dim, out_dim, hidden)
    fused = prepare_params(params)

    # Case 1: small batch -> single grid step (TB = 128, lane-padded).
    B = 8
    state = jax.random.normal(k_state, (B, in_dim), jnp.float32)
    eps = jax.random.normal(k_eps, (B, out_dim), jnp.float32)
    action, mu, std = actor_forward(state, fused, eps)
    jax.block_until_ready((action, mu, std))
    ra, rm, rs = reference_forward(state, params, eps)
    assert jnp.allclose(action, ra, atol=1e-5)
    assert jnp.allclose(mu, rm, atol=1e-5)
    assert jnp.allclose(std, rs, atol=1e-5)

    # Case 2: ragged batch -> 2-step parallel grid (TB = 256) + padding path.
    B2 = 300
    state2 = jax.random.normal(k_state2, (B2, in_dim), jnp.float32)
    eps2 = jax.random.normal(k_eps2, (B2, out_dim), jnp.float32)
    a2, m2, s2 = actor_forward(state2, fused, eps2)
    jax.block_until_ready((a2, m2, s2))
    ra2, rm2, rs2 = reference_forward(state2, params, eps2)
    assert jnp.allclose(a2, ra2, atol=1e-5)
    assert jnp.allclose(m2, rm2, atol=1e-5)
    assert jnp.allclose(s2, rs2, atol=1e-5)

    print("KERNEL_OK")
</pallas_src>

<mosaic_0001>
module attributes {stable_mosaic.version = 11 : i64} {
  func.func @actor_kernel(%arg0: i32, %arg1: memref<16x128xf32, #tpu.memory_space<vmem>>, %arg2: memref<4x128xf32, #tpu.memory_space<vmem>>, %arg3: memref<32x16xf32, #tpu.memory_space<vmem>>, %arg4: memref<32x1xf32, #tpu.memory_space<vmem>>, %arg5: memref<8x32xf32, #tpu.memory_space<vmem>>, %arg6: memref<8x1xf32, #tpu.memory_space<vmem>>, %arg7: memref<12x128xf32, #tpu.memory_space<vmem>>) attributes {dimension_semantics = [#tpu.dimension_semantics<parallel>], iteration_bounds = array<i64: 1>, scalar_prefetch = 0 : i64, scratch_operands = 0 : i64, tpu.core_type = #tpu.core_type<tc>, window_params = [{transform_indices = @transform_0, window_bounds = array<i64: 16, 128>}, {transform_indices = @transform_1, window_bounds = array<i64: 4, 128>}, {pipeline_mode = #tpu.pipeline_mode<synchronous>, transform_indices = @transform_2, window_bounds = array<i64: 32, 16>}, {pipeline_mode = #tpu.pipeline_mode<synchronous>, transform_indices = @transform_3, window_bounds = array<i64: 32, 1>}, {pipeline_mode = #tpu.pipeline_mode<synchronous>, transform_indices = @transform_4, window_bounds = array<i64: 8, 32>}, {pipeline_mode = #tpu.pipeline_mode<synchronous>, transform_indices = @transform_5, window_bounds = array<i64: 8, 1>}, {transform_indices = @transform_6, window_bounds = array<i64: 12, 128>}]} {
    %c0 = arith.constant 0 : index
    %c0_0 = arith.constant 0 : index
    %0 = vector.load %arg3[%c0, %c0_0] : memref<32x16xf32, #tpu.memory_space<vmem>>, vector<32x16xf32>
    %c0_1 = arith.constant 0 : index
    %c0_2 = arith.constant 0 : index
    %1 = vector.load %arg1[%c0_1, %c0_2] : memref<16x128xf32, #tpu.memory_space<vmem>>, vector<16x128xf32>
    %cst = arith.constant dense<0.000000e+00> : vector<32x128xf32>
    %2 = tpu.matmul %0, %1, %cst {dimension_numbers = #tpu.dot_dimension_numbers<[1], [0], [0], [1], [0, 0, 1, 1], [], []>} : vector<32x16xf32>, vector<16x128xf32>, vector<32x128xf32> -> vector<32x128xf32>
    %c0_3 = arith.constant 0 : index
    %c0_4 = arith.constant 0 : index
    %3 = vector.load %arg4[%c0_3, %c0_4] : memref<32x1xf32, #tpu.memory_space<vmem>>, vector<32x1xf32>
    %4 = vector.broadcast %3 : vector<32x1xf32> to vector<32x128xf32>
    %5 = arith.addf %2, %4 : vector<32x128xf32>
    %cst_5 = arith.constant 0.000000e+00 : f32
    %6 = vector.broadcast %cst_5 : f32 to vector<32x128xf32>
    %7 = arith.maximumf %5, %6 : vector<32x128xf32>
    %c0_6 = arith.constant 0 : index
    %c0_7 = arith.constant 0 : index
    %8 = vector.load %arg5[%c0_6, %c0_7] : memref<8x32xf32, #tpu.memory_space<vmem>>, vector<8x32xf32>
    %cst_8 = arith.constant dense<0.000000e+00> : vector<8x128xf32>
    %9 = tpu.matmul %8, %7, %cst_8 {dimension_numbers = #tpu.dot_dimension_numbers<[1], [0], [0], [1], [0, 0, 1, 1], [], []>} : vector<8x32xf32>, vector<32x128xf32>, vector<8x128xf32> -> vector<8x128xf32>
    %c0_9 = arith.constant 0 : index
    %c0_10 = arith.constant 0 : index
    %10 = vector.load %arg6[%c0_9, %c0_10] : memref<8x1xf32, #tpu.memory_space<vmem>>, vector<8x1xf32>
    %11 = vector.broadcast %10 : vector<8x1xf32> to vector<8x128xf32>
    %12 = arith.addf %9, %11 : vector<8x128xf32>
    %13 = math.tanh %12 : vector<8x128xf32>
    %14 = vector.extract_strided_slice %13 {offsets = [0, 0], sizes = [4, 128], strides = [1, 1]} : vector<8x128xf32> to vector<4x128xf32>
    %15 = vector.extract_strided_slice %13 {offsets = [4, 0], sizes = [4, 128], strides = [1, 1]} : vector<8x128xf32> to vector<4x128xf32>
    %cst_11 = arith.constant 1.000000e+01 : f32
    %16 = vector.broadcast %cst_11 : f32 to vector<4x128xf32>
    %17 = arith.mulf %16, %15 : vector<4x128xf32>
    %cst_12 = arith.constant -1.000000e+01 : f32
    %18 = vector.broadcast %cst_12 : f32 to vector<4x128xf32>
    %19 = arith.addf %17, %18 : vector<4x128xf32>
    %20 = math.exp %19 : vector<4x128xf32>
    %c0_13 = arith.constant 0 : index
    %c0_14 = arith.constant 0 : index
    %21 = vector.load %arg2[%c0_13, %c0_14] : memref<4x128xf32, #tpu.memory_space<vmem>>, vector<4x128xf32>
    %22 = arith.mulf %20, %21 : vector<4x128xf32>
    %23 = arith.addf %14, %22 : vector<4x128xf32>
    %c0_15 = arith.constant 0 : index
    %c0_16 = arith.constant 0 : index
    %24 = vector.load %arg7[%c0_15, %c0_16] : memref<12x128xf32, #tpu.memory_space<vmem>>, vector<4x128xf32>
    tpu.vector_store %arg7[%c0_15, %c0_16], %23 {strides = array<i32>} : memref<12x128xf32, #tpu.memory_space<vmem>>, vector<4x128xf32>,
    %c4 = arith.constant 4 : index
    %c0_17 = arith.constant 0 : index
    %25 = vector.load %arg7[%c4, %c0_17] : memref<12x128xf32, #tpu.memory_space<vmem>>, vector<4x128xf32>
    tpu.vector_store %arg7[%c4, %c0_17], %14 {strides = array<i32>} : memref<12x128xf32, #tpu.memory_space<vmem>>, vector<4x128xf32>,
    %c8 = arith.constant 8 : index
    %c0_18 = arith.constant 0 : index
    %26 = vector.load %arg7[%c8, %c0_18] : memref<12x128xf32, #tpu.memory_space<vmem>>, vector<4x128xf32>
    tpu.vector_store %arg7[%c8, %c0_18], %20 {strides = array<i32>} : memref<12x128xf32, #tpu.memory_space<vmem>>, vector<4x128xf32>,
    return
  }
  func.func @transform_0(%arg0: i32) -> (i32, i32) {
    %c0_i32 = arith.constant 0 : i32
    %c0_i32_0 = arith.constant 0 : i32
    return %c0_i32, %arg0 : i32, i32
  }
  func.func @transform_1(%arg0: i32) -> (i32, i32) {
    %c0_i32 = arith.constant 0 : i32
    %c0_i32_0 = arith.constant 0 : i32
    return %c0_i32, %arg0 : i32, i32
  }
  func.func @transform_2(%arg0: i32) -> (i32, i32) {
    %c0_i32 = arith.constant 0 : i32
    %c0_i32_0 = arith.constant 0 : i32
    %c0_i32_1 = arith.constant 0 : i32
    return %c0_i32, %c0_i32_0 : i32, i32
  }
  func.func @transform_3(%arg0: i32) -> (i32, i32) {
    %c0_i32 = arith.constant 0 : i32
    %c0_i32_0 = arith.constant 0 : i32
    %c0_i32_1 = arith.constant 0 : i32
    return %c0_i32, %c0_i32_0 : i32, i32
  }
  func.func @transform_4(%arg0: i32) -> (i32, i32) {
    %c0_i32 = arith.constant 0 : i32
    %c0_i32_0 = arith.constant 0 : i32
    %c0_i32_1 = arith.constant 0 : i32
    return %c0_i32, %c0_i32_0 : i32, i32
  }
  func.func @transform_5(%arg0: i32) -> (i32, i32) {
    %c0_i32 = arith.constant 0 : i32
    %c0_i32_0 = arith.constant 0 : i32
    %c0_i32_1 = arith.constant 0 : i32
    return %c0_i32, %c0_i32_0 : i32, i32
  }
  func.func @transform_6(%arg0: i32) -> (i32, i32) {
    %c0_i32 = arith.constant 0 : i32
    %c0_i32_0 = arith.constant 0 : i32
    return %c0_i32, %arg0 : i32, i32
  }
}

</mosaic_0001>

<llo_original>
// kernel: tpu_custom_call.1
$region0: #{tpu_custom_call.1}
  #allocation0 [shape = 'u32[]', space=smem, size = 0x4, offset = 0x4, fixed_abs, tag = 'smem constant byte address 0x4 - core index']
  #allocation1 [shape = 'u32[144,128]{1,0:T(1,128)}', space=vmem, size = 0x12000, scoped, tag = 'internal scratch']
  %s0 = inlined_call_operand.vmem [shape: f32[16,128], index: 0, kind: input, shape index: {}]
  %s1 = inlined_call_operand.vmem [shape: f32[4,128], index: 1, kind: input, shape index: {}]
  %s2 = inlined_call_operand.vmem [shape: f32[32,16], index: 2, kind: input, shape index: {}]
  %s3 = inlined_call_operand.vmem [shape: f32[32,1], index: 3, kind: input, shape index: {}]
  %s4 = inlined_call_operand.vmem [shape: f32[8,32], index: 4, kind: input, shape index: {}]
  %s5 = inlined_call_operand.vmem [shape: f32[8,1], index: 5, kind: input, shape index: {}]
  %s6 = inlined_call_operand.hbm [shape: f32[12,128], index: 6, kind: output, shape index: {}]
  %s7 = sld [smem:[#allocation0]]
  $region34: #{tpu_custom_call.1} parent=0
    _
  %s9 = ssub.s32 1, %s7
  %s10 = scalar_select 0, %s9, %s7
  $region1: #{tpu_custom_call.1} parent=0
    #allocation2 [shape = 'u8[8192]{0}', space=vmem, size = 0x2000, scoped, tag = 'output window, operand 0, single buffered']
    #allocation3 [shape = 's32[1]{0}', space=sflag, size = 0x4, scoped, tag = 'scoped memory for tpu_custom_call.1']
    %11 = vsyncpa [#allocation3], 0
    // Predicated region
    $region2: #{tpu_custom_call.1} parent=1 // pred_check
      _
    $region3: #{tpu_custom_call.1} parent=1 // pred_check_branch
      %13 = sbr.rel (0) target = $region5
    $region4: #{tpu_custom_call.1} parent=1 // pred_region
      _
    $region5: #{tpu_custom_call.1} parent=1 // pred_fallthru
      _
    // Predicated region
    $region6: #{tpu_custom_call.1} parent=1 // pred_check
      _
    $region7: #{tpu_custom_call.1} parent=1 // pred_check_branch
      %15 = sbr.rel (0) target = $region9
    $region8: #{tpu_custom_call.1} parent=1 // pred_region
      _
    $region9: #{tpu_custom_call.1} parent=1 // pred_fallthru
      _
    // Predicated region
    $region10: #{tpu_custom_call.1} parent=1 // pred_check
      _
    $region11: #{tpu_custom_call.1} parent=1 // pred_check_branch
      %17 = sbr.rel (0) target = $region13
    $region12: #{tpu_custom_call.1} parent=1 // pred_region
      _
    $region13: #{tpu_custom_call.1} parent=1 // pred_fallthru
      _
    // Predicated region
    $region14: #{tpu_custom_call.1} parent=1 // pred_check
      _
    $region15: #{tpu_custom_call.1} parent=1 // pred_check_branch
      %19 = sbr.rel (0) target = $region17
    $region16: #{tpu_custom_call.1} parent=1 // pred_region
      _
    $region17: #{tpu_custom_call.1} parent=1 // pred_fallthru
      _
    // Predicated region
    $region18: #{tpu_custom_call.1} parent=1 // pred_check
      _
    $region19: #{tpu_custom_call.1} parent=1 // pred_check_branch
      %21 = sbr.rel (0) target = $region21
    $region20: #{tpu_custom_call.1} parent=1 // pred_region
      _
    $region21: #{tpu_custom_call.1} parent=1 // pred_fallthru
      _
    // Predicated region
    $region22: #{tpu_custom_call.1} parent=1 // pred_check
      _
    $region23: #{tpu_custom_call.1} parent=1 // pred_check_branch
      %23 = sbr.rel (0) target = $region25
    $region24: #{tpu_custom_call.1} parent=1 // pred_region
      _
    $region25: #{tpu_custom_call.1} parent=1 // pred_fallthru
      _
    %v24 = vld [vmem:[%s2] sm:$0xff]
    %v25 = vld [vmem:[%s2 + $0x8] sm:$0xff]
    %v26 = vld [vmem:[%s2 + $0x10] sm:$0xff]
    %v27 = vld [vmem:[%s2 + $0x18] sm:$0xff]
    %v28 = vld [vmem:[%s0] sm:$0xff]
    %v29 = vld [vmem:[%s0 + $0x8] sm:$0xff]
    %v30 = vld [vmem:[%s3] sm:$0xff]
    %v31 = vld [vmem:[%s3 + $0x8] sm:$0xff]
    %v32 = vld [vmem:[%s3 + $0x10] sm:$0xff]
    %v33 = vld [vmem:[%s3 + $0x18] sm:$0xff]
    %35 = vset.pattern.permute.xlu0 0
    %36 = vperm.xlu0 %35, %v30
    %v37 = vpop.permute.xlu0 %36
    %40 = vset.pattern.permute.xlu0 0
    %41 = vperm.xlu0 %40, %v31
    %v42 = vpop.permute.xlu0 %41
    %45 = vset.pattern.permute.xlu0 0
    %46 = vperm.xlu0 %45, %v32
    %v47 = vpop.permute.xlu0 %46
    %50 = vset.pattern.permute.xlu0 0
    %51 = vperm.xlu0 %50, %v33
    %v52 = vpop.permute.xlu0 %51
    %vm54 = vcmask 130048
    %v56 = vsel %vm54, %v24, 0
    %v59 = vsel %vm54, %v25, 0
    %v62 = vsel %vm54, %v26, 0
    %v65 = vsel %vm54, %v27, 0
    %67 = vmatprep.subr.mxu0 0.0
    %68 = vmatpush1.msra.mxu0 0.0
    %69 = vmatprep.subr.mxu0 0.0
    %70 = vmatpush1.msra.mxu0 0.0
    %71 = vmatprep.subr.mxu0 0.0
    %72 = vmatpush1.msra.mxu0 0.0
    %73 = vmatprep.subr.mxu0 0.0
    %74 = vmatpush1.msra.mxu0 0.0
    %75 = vmatprep.subr.mxu0 0.0
    %76 = vmatpush1.msra.mxu0 0.0
    %77 = vmatprep.subr.mxu0 0.0
    %78 = vmatpush1.msra.mxu0 0.0
    %79 = vmatprep.subr.mxu0 0.0
    %80 = vmatpush1.msra.mxu0 0.0
    %81 = vmatprep.subr.mxu0 0.0
    %82 = vmatpush1.msra.mxu0 0.0
    %83 = vmatprep.subr.mxu0 0.0
    %84 = vmatpush1.msra.mxu0 0.0
    %85 = vmatprep.subr.mxu0 0.0
    %86 = vmatpush1.msra.mxu0 0.0
    %87 = vmatprep.subr.mxu0 0.0
    %88 = vmatpush1.msra.mxu0 0.0
    %89 = vmatprep.subr.mxu0 0.0
    %90 = vmatpush1.msra.mxu0 0.0
    %91 = vmatprep.subr.mxu0 0.0
    %92 = vmatpush1.msra.mxu0 0.0
    %93 = vmatprep.subr.mxu0 0.0
    %94 = vmatpush1.msra.mxu0 0.0
    %95 = vmatprep.subr.mxu0 0.0
    %96 = vmatpush1.msra.mxu0 %v29
    %97 = vmatprep.subr.mxu0 0.0
    %98 = vmatpush1.msra.mxu0 %v28
    %99 = vmatprep.subr.mxu0 0.0
    %100 = vmatpush2.msra.mxu0 0.0
    %101 = vmatprep.subr.mxu0 0.0
    %102 = vmatpush2.msra.mxu0 0.0
    %103 = vmatprep.subr.mxu0 0.0
    %104 = vmatpush2.msra.mxu0 0.0
    %105 = vmatprep.subr.mxu0 0.0
    %106 = vmatpush2.msra.mxu0 0.0
    %107 = vmatprep.subr.mxu0 0.0
    %108 = vmatpush2.msra.mxu0 0.0
    %109 = vmatprep.subr.mxu0 0.0
    %110 = vmatpush2.msra.mxu0 0.0
    %111 = vmatprep.subr.mxu0 0.0
    %112 = vmatpush2.msra.mxu0 0.0
    %113 = vmatprep.subr.mxu0 0.0
    %114 = vmatpush2.msra.mxu0 0.0
    %115 = vmatprep.subr.mxu0 0.0
    %116 = vmatpush2.msra.mxu0 0.0
    %117 = vmatprep.subr.mxu0 0.0
    %118 = vmatpush2.msra.mxu0 0.0
    %119 = vmatprep.subr.mxu0 0.0
    %120 = vmatpush2.msra.mxu0 0.0
    %121 = vmatprep.subr.mxu0 0.0
    %122 = vmatpush2.msra.mxu0 0.0
    %123 = vmatprep.subr.mxu0 0.0
    %124 = vmatpush2.msra.mxu0 0.0
    %125 = vmatprep.subr.mxu0 0.0
    %126 = vmatpush2.msra.mxu0 0.0
    %127 = vmatprep.subr.mxu0 0.0
    %128 = vmatpush2.msra.mxu0 0.0
    %129 = vmatprep.subr.mxu0 0.0
    %130 = vmatpush2.msra.mxu0 0.0
    %131 = vmatprep.mubr.f32.mxu0 0.0
    %132 = vmatmul.mubr.f32.gmra.mxu0 %v56
    %v133 = vpop.f32.mrf.mxu0
    %v134 = vadd.f32 %v37, %v133
    %v135 = vpop.f32.mrf.mxu0
    %136 = vmatprep.mubr.f32.mxu0 0.0
    %137 = vmatmul.mubr.f32.gmra.mxu0 %v59
    %v138 = vpop.f32.mrf.mxu0
    %v139 = vadd.f32 %v42, %v138
    %v140 = vpop.f32.mrf.mxu0
    %141 = vmatprep.mubr.f32.mxu0 0.0
    %142 = vmatmul.mubr.f32.gmra.mxu0 %v62
    %v143 = vpop.f32.mrf.mxu0
    %v144 = vadd.f32 %v47, %v143
    %v145 = vpop.f32.mrf.mxu0
    %146 = vmatprep.mubr.f32.mxu0 0.0
    %147 = vmatmul.mubr.f32.gmra.mxu0 %v65
    %v148 = vpop.f32.mrf.mxu0
    %v149 = vadd.f32 %v52, %v148
    %v150 = vpop.f32.mrf.mxu0
    %151 = vdwg.mxu0
    %v152 = vmax.f32 %v134, 0.0
    %v153 = vmax.f32 %v139, 0.0
    %v154 = vmax.f32 %v144, 0.0
    %v155 = vmax.f32 %v149, 0.0
    %v156 = vld [vmem:[%s4] sm:$0xff]
    %v157 = vld [vmem:[%s5] sm:$0xff]
    %159 = vset.pattern.permute.xlu0 0
    %160 = vperm.xlu0 %159, %v157
    %v161 = vpop.permute.xlu0 %160
    %vm163 = vcmask 261120
    %v165 = vsel %vm163, %v156, 0
    %167 = vmatprep.subr.mxu0 0.0
    %168 = vmatpush1.msra.mxu0 0.0
    %169 = vmatprep.subr.mxu0 0.0
    %170 = vmatpush1.msra.mxu0 0.0
    %171 = vmatprep.subr.mxu0 0.0
    %172 = vmatpush1.msra.mxu0 0.0
    %173 = vmatprep.subr.mxu0 0.0
    %174 = vmatpush1.msra.mxu0 0.0
    %175 = vmatprep.subr.mxu0 0.0
    %176 = vmatpush1.msra.mxu0 0.0
    %177 = vmatprep.subr.mxu0 0.0
    %178 = vmatpush1.msra.mxu0 0.0
    %179 = vmatprep.subr.mxu0 0.0
    %180 = vmatpush1.msra.mxu0 0.0
    %181 = vmatprep.subr.mxu0 0.0
    %182 = vmatpush1.msra.mxu0 0.0
    %183 = vmatprep.subr.mxu0 0.0
    %184 = vmatpush1.msra.mxu0 0.0
    %185 = vmatprep.subr.mxu0 0.0
    %186 = vmatpush1.msra.mxu0 0.0
    %187 = vmatprep.subr.mxu0 0.0
    %188 = vmatpush1.msra.mxu0 0.0
    %189 = vmatprep.subr.mxu0 0.0
    %190 = vmatpush1.msra.mxu0 0.0
    %191 = vmatprep.subr.mxu0 0.0
    %192 = vmatpush1.msra.mxu0 %v155
    %193 = vmatprep.subr.mxu0 0.0
    %194 = vmatpush1.msra.mxu0 %v154
    %195 = vmatprep.subr.mxu0 0.0
    %196 = vmatpush1.msra.mxu0 %v153
    %197 = vmatprep.subr.mxu0 0.0
    %198 = vmatpush1.msra.mxu0 %v152
    %199 = vmatprep.subr.mxu0 0.0
    %200 = vmatpush2.msra.mxu0 0.0
    %201 = vmatprep.subr.mxu0 0.0
    %202 = vmatpush2.msra.mxu0 0.0
    %203 = vmatprep.subr.mxu0 0.0
    %204 = vmatpush2.msra.mxu0 0.0
    %205 = vmatprep.subr.mxu0 0.0
    %206 = vmatpush2.msra.mxu0 0.0
    %207 = vmatprep.subr.mxu0 0.0
    %208 = vmatpush2.msra.mxu0 0.0
    %209 = vmatprep.subr.mxu0 0.0
    %210 = vmatpush2.msra.mxu0 0.0
    %211 = vmatprep.subr.mxu0 0.0
    %212 = vmatpush2.msra.mxu0 0.0
    %213 = vmatprep.subr.mxu0 0.0
    %214 = vmatpush2.msra.mxu0 0.0
    %215 = vmatprep.subr.mxu0 0.0
    %216 = vmatpush2.msra.mxu0 0.0
    %217 = vmatprep.subr.mxu0 0.0
    %218 = vmatpush2.msra.mxu0 0.0
    %219 = vmatprep.subr.mxu0 0.0
    %220 = vmatpush2.msra.mxu0 0.0
    %221 = vmatprep.subr.mxu0 0.0
    %222 = vmatpush2.msra.mxu0 0.0
    %223 = vmatprep.subr.mxu0 0.0
    %224 = vmatpush2.msra.mxu0 0.0
    %225 = vmatprep.subr.mxu0 0.0
    %226 = vmatpush2.msra.mxu0 0.0
    %227 = vmatprep.subr.mxu0 0.0
    %228 = vmatpush2.msra.mxu0 0.0
    %229 = vmatprep.subr.mxu0 0.0
    %230 = vmatpush2.msra.mxu0 0.0
    %231 = vmatprep.mubr.f32.mxu0 0.0
    %232 = vmatmul.mubr.f32.gmra.mxu0 %v165
    %v233 = vpop.f32.mrf.mxu0
    %v234 = vadd.f32 %v161, %v233
    %v235 = vpop.f32.mrf.mxu0
    %236 = vdwg.mxu0
    %v237 = vtanh.pop %v234
    %v238 = vmul.f32 %v237, 10.0
    %v239 = vadd.f32 %v238, -10.0
    %v240 = vmul.f32 %v239, 1.442695
    %v241 = vpow.pop %v240
    %v242 = vld [vmem:[%s1] sm:$0xf]
    %v244 = vrot.slane %v242, 4
    %v246 = vmul.f32 %v241, %v244
    %v248 = vrot.slane %v246, 4
    %v250 = vadd.f32 %v237, %v248
    %251 = vst [vmem:[#allocation2] sm:$0xf] %v250
    %252 = vst [vmem:[#allocation2 + $0x4] sm:$0xf] %v237
    %253 = vst [vmem:[#allocation2 + $0x4] sm:$0xf0] %v241
    // Predicated region
    $region26: #{tpu_custom_call.1} parent=1 // pred_check
      _
    $region27: #{tpu_custom_call.1} parent=1 // pred_check_branch
      %255 = sbr.rel (0) target = $region29
    $region28: #{tpu_custom_call.1} parent=1 // pred_region
      %s257 = ssub.s32 256, 256
      %258 = vsyncadd [#allocation3], %s257
      %s259 = sshll.u32 [#allocation2], 4
      %s260 = int_to_ptr.vmem [resolvable:$true] %s259
      %265 = dma.vmem_to_hbm [thread:$0]  %s260, 256, %s6, [#allocation3], 128, 128, 8
    $region29: #{tpu_custom_call.1} parent=1 // pred_fallthru
      _
    // Predicated region
    $region30: #{tpu_custom_call.1} parent=1 // pred_check
      _
    $region31: #{tpu_custom_call.1} parent=1 // pred_check_branch
      %267 = sbr.rel (0) target = $region33
    $region32: #{tpu_custom_call.1} parent=1 // pred_region
      %268 = dma.done [#allocation3], 256
    $region33: #{tpu_custom_call.1} parent=1 // pred_fallthru
      _
    %269 = vsyncpa [#allocation3], 1

</llo_original>
